<compile_context>
chip_gen: v7x
topology: tpu7x:2x2x1
jax: 0.10.0
libtpu: 0.0.40
codegen_flags: <defaults>
</compile_context>

<pallas_src>
import functools
import math

import jax
import jax.numpy as jnp
from jax import lax
from jax.experimental import pallas as pl
from jax.experimental.pallas import tpu as pltpu


def _round_up(x, m):
    return (x + m - 1) // m * m


def _cdiv(a, b):
    return (a + b - 1) // b


# ---------------------------------------------------------------------------
# Fast path: table resident in VMEM, gather via one-hot matmul on the MXU.
# ---------------------------------------------------------------------------
def _embed_onehot_kernel(ids_ref, tab_ref, o_ref, *, scale):
    """One grid step = `rows` packed output rows (rows * pack tokens).

    ids_ref : VMEM int32 [pack, rows, 1]   token (r*pack + p) at [p, r, 0]
    tab_ref : VMEM f32   [pack, vocab, lane_w]  (resident across grid steps)
              tab_ref[p, v, p*d : (p+1)*d] == table[v, :]
    o_ref   : VMEM f32   [rows, lane_w]    lane-dense packed output tile
    """
    pack, vocab, _ = tab_ref.shape
    rows = o_ref.shape[0]

    col = lax.broadcasted_iota(jnp.int32, (rows, vocab), 1)
    acc = None
    for p in range(pack):                       # static unroll
        ids_p = ids_ref[p]                      # (rows, 1) int32
        onehot = (ids_p == col).astype(tab_ref.dtype)
        part = jnp.dot(onehot, tab_ref[p], preferred_element_type=jnp.float32)
        acc = part if acc is None else acc + part
    o_ref[...] = (acc * scale).astype(o_ref.dtype)


def _embeddings_fast(flat_ids, table, d_model, scale, *, rows_per_tile=256):
    vocab, _ = table.shape
    n_tok = flat_ids.shape[0]

    # Lane packing: P tokens per 128-lane output row when d_model < 128.
    pack = 128 // d_model if (d_model < 128 and 128 % d_model == 0) else 1
    lane_w = pack * d_model

    n_rows_needed = _cdiv(n_tok, pack)
    r_tile = min(rows_per_tile, _round_up(n_rows_needed, 8))
    if n_rows_needed > 8:
        # >= 2 grid steps so the "parallel" axis can shard across both TCs (v7x).
        r_tile = min(r_tile, _round_up(_cdiv(n_rows_needed, 2), 8))
    r_tile = max(8, r_tile)
    n_rows = _round_up(n_rows_needed, r_tile)

    # ids laid out as (pack, n_rows, 1): token (r*pack + p) lives at [p, r, 0].
    ids_pad = jnp.pad(flat_ids, (0, n_rows * pack - n_tok))
    ids_cols = ids_pad.reshape(n_rows, pack).T.reshape(pack, n_rows, 1)

    # Lane-expanded table: tab_exp[p, v, p*d:(p+1)*d] = table[v, :].
    tab_exp = jnp.stack(
        [jnp.pad(table, ((0, 0), (p * d_model, lane_w - (p + 1) * d_model)))
         for p in range(pack)])

    kernel = functools.partial(_embed_onehot_kernel, scale=scale)

    out = pl.pallas_call(
        kernel,
        out_shape=jax.ShapeDtypeStruct((n_rows, lane_w), jnp.float32),
        grid_spec=pltpu.PrefetchScalarGridSpec(
            num_scalar_prefetch=0,
            grid=(n_rows // r_tile,),
            in_specs=[
                pl.BlockSpec((pack, r_tile, 1), lambda i: (0, i, 0)),
                # Same block every step -> table stays resident in VMEM.
                pl.BlockSpec((pack, vocab, lane_w), lambda i: (0, 0, 0)),
            ],
            out_specs=pl.BlockSpec((r_tile, lane_w), lambda i: (i, 0)),
        ),
        compiler_params=pltpu.CompilerParams(
            dimension_semantics=("parallel",),
            vmem_limit_bytes=32 * 1024 * 1024,
        ),
    )(ids_cols, tab_exp)

    # (n_rows, pack*d_model) -> (n_rows*pack, d_model); padded rows sliced off.
    return out.reshape(n_rows * pack, d_model)[:n_tok]


# ---------------------------------------------------------------------------
# Large-vocab path: manual HBM row-gather with a deep DMA ring.
# ---------------------------------------------------------------------------
def _embed_dma_kernel(ids_ref, table_ref, o_ref, rows_ref, sems,
                      *, scale, block_tokens, dma_depth, group):
    """Gather `block_tokens` embedding rows for this grid step, scale, store.

    ids_ref   : SMEM int32 [n_chunk + K]  scalar-prefetched (padded) token ids
    table_ref : HBM  [vocab, d_model]     raw ref (memory_space=pl.ANY)
    o_ref     : VMEM [T, d_model]         output tile for this step
    rows_ref  : VMEM [T, d_model]         scratch: gathered embedding rows
    sems      : DMA semaphores [K]        ring of in-flight row gathers
    """
    T, K, G = block_tokens, dma_depth, group
    base = pl.program_id(0) * T

    def start(t, tok):
        pltpu.make_async_copy(
            table_ref.at[pl.ds(tok, 1), :],
            rows_ref.at[pl.ds(t, 1), :],
            sems.at[t % K],
        ).start()

    # Prime the ring: K row-gather DMAs in flight.
    for t in range(K):                          # K is a small static int
        start(t, ids_ref[base + t])

    # Retire / re-issue in groups of G rows.  All SMEM id reads of the group
    # happen before any semaphore wait (a DMA wait breaks SMEM sst->sld
    # forwarding), so at most one scalar stall per G rows.
    @pl.loop(0, T // G)
    def _(j):
        t0 = j * G
        cur_toks = [ids_ref[base + t0 + g] for g in range(G)]
        nxt_toks = [ids_ref[base + t0 + g + K] for g in range(G)]
        for g in range(G):
            # Wait descriptor rebuilt with the same src/dst as start().
            pltpu.make_async_copy(
                table_ref.at[pl.ds(cur_toks[g], 1), :],
                rows_ref.at[pl.ds(t0 + g, 1), :],
                sems.at[(t0 + g) % K],
            ).wait()
        for g in range(G):
            t_issue = t0 + g + K

            @pl.when(t_issue < T)
            def _issue(t=t_issue, tok=nxt_toks[g]):
                start(t, tok)

    # One dense scaled store for the whole token tile.
    # TODO(synk): lane-pack the store when d_model < 128 (done in fast path).
    o_ref[...] = (rows_ref[...] * scale).astype(o_ref.dtype)


def _embeddings_dma(flat_ids, table, d_model, scale, *, block_tokens=256,
                    dma_depth=32, group=8, max_prefetch_tokens=32768):
    n_tok = flat_ids.shape[0]

    # Tokens per grid step: multiple of 8 sublanes; cap so rows scratch +
    # double-buffered output (~12 * T * d_model bytes, f32) stays well inside
    # VMEM on every generation (v7x has only 64 MiB physical).
    t_cap_vmem = max(8, ((12 * 1024 * 1024) // (12 * d_model)) // 8 * 8)
    T = min(block_tokens, _round_up(n_tok, 8), t_cap_vmem)
    if n_tok > 8:
        # >= 2 grid steps so "parallel" can use both TensorCores on v7x.
        T = min(T, _round_up(_cdiv(n_tok, 2), 8))
    T = max(8, _round_up(T, 8))
    # DMA ring depth: 32 works well on v5e/v6e; 48-64 saturates v7x HBM.
    K = max(1, min(dma_depth, T))
    G = group if T % group == 0 else 8          # T is a multiple of 8

    n_pad = _round_up(n_tok, T)
    flat_pad = jnp.pad(flat_ids, (0, n_pad - n_tok))

    kernel = functools.partial(_embed_dma_kernel, scale=scale,
                               block_tokens=T, dma_depth=K, group=G)

    def one_call(ids_chunk, n_steps):
        return pl.pallas_call(
            kernel,
            out_shape=jax.ShapeDtypeStruct((n_steps * T, d_model), jnp.float32),
            grid_spec=pltpu.PrefetchScalarGridSpec(
                num_scalar_prefetch=1,
                grid=(n_steps,),
                in_specs=[pl.BlockSpec(memory_space=pl.ANY)],   # table in HBM
                out_specs=pl.BlockSpec((T, d_model), lambda i, ids: (i, 0)),
                scratch_shapes=[
                    pltpu.VMEM((T, d_model), table.dtype),
                    pltpu.SemaphoreType.DMA((K,)),
                ],
            ),
            compiler_params=pltpu.CompilerParams(
                dimension_semantics=("parallel",),
                vmem_limit_bytes=32 * 1024 * 1024,
            ),
        )(ids_chunk, table)

    # Keep the scalar-prefetched id array small in SMEM: at most
    # `max_prefetch_tokens` ids per pallas_call (SMEM 1-D arrays pad to pow2).
    chunk = max(T, (max_prefetch_tokens // T) * T)
    outs = []
    for s in range(0, n_pad, chunk):
        e = min(s + chunk, n_pad)
        # K sentinel ids (0) so in-kernel look-ahead reads stay in bounds.
        ids_c = jnp.concatenate([flat_pad[s:e], jnp.zeros((K,), jnp.int32)])
        outs.append(one_call(ids_c, (e - s) // T))
    out = outs[0] if len(outs) == 1 else jnp.concatenate(outs, axis=0)
    return out[:n_tok]


# ---------------------------------------------------------------------------
# Public wrapper: Embeddings.forward(x) = lut(x) * sqrt(d_model)
# ---------------------------------------------------------------------------
def embeddings_forward(x, table, d_model=None, *, fast_path_max_vocab=4096,
                       fast_path_max_table_bytes=4 * 1024 * 1024,
                       block_tokens=256, dma_depth=32):
    """x: int token ids [...]; table: [vocab, d_model] -> f32 [..., d_model]."""
    vocab, dm = table.shape
    if d_model is None:
        d_model = dm
    assert dm == d_model
    n_tok = int(x.size)
    scale = math.sqrt(d_model)

    # Clamp ids (PyTorch raises on OOB; clamping keeps DMA sources in bounds).
    flat_ids = jnp.clip(x.reshape(n_tok).astype(jnp.int32), 0, vocab - 1)

    pack = 128 // d_model if (d_model < 128 and 128 % d_model == 0) else 1
    lane_w = pack * d_model
    tab_exp_bytes = pack * vocab * lane_w * table.dtype.itemsize
    use_fast = (vocab <= fast_path_max_vocab
                and tab_exp_bytes <= fast_path_max_table_bytes)

    if use_fast:
        out_flat = _embeddings_fast(flat_ids, table, d_model, scale)
    else:
        out_flat = _embeddings_dma(flat_ids, table, d_model, scale,
                                   block_tokens=block_tokens,
                                   dma_depth=dma_depth)
    return out_flat.reshape(*x.shape, d_model)


if __name__ == "__main__":
    key = jax.random.PRNGKey(0)
    k_tab, k_ids, k_ids2, k_tab2, k_ids3, k_tab3, k_ids4 = jax.random.split(key, 7)

    # --- Fast (VMEM-resident table, one-hot MXU) path, lane-packed output ---
    d_model, vocab = 32, 50
    table = jax.random.normal(k_tab, (vocab, d_model), dtype=jnp.float32)

    B, S = 2, 8
    x = jax.random.randint(k_ids, (B, S), 0, vocab, dtype=jnp.int32)
    out = jax.block_until_ready(embeddings_forward(x, table, d_model))
    ref = table[x] * math.sqrt(d_model)
    assert out.shape == (B, S, d_model)
    # Loose-ish tolerance: the MXU may run the f32 one-hot matmul as bf16
    # passes; a mis-gathered row would still be off by O(1) and fail.
    assert jnp.allclose(out, ref, atol=1e-2, rtol=1e-2)

    # Ragged token count (exercises row padding).
    B2, S2 = 2, 5
    x2 = jax.random.randint(k_ids2, (B2, S2), 0, vocab, dtype=jnp.int32)
    out2 = jax.block_until_ready(embeddings_forward(x2, table, d_model))
    ref2 = table[x2] * math.sqrt(d_model)
    assert out2.shape == (B2, S2, d_model)
    assert jnp.allclose(out2, ref2, atol=1e-2, rtol=1e-2)

    # Fast path, d_model already lane-dense (pack = 1), multi-step grid.
    d4, v4 = 128, 300
    table4 = jax.random.normal(k_tab3, (v4, d4), dtype=jnp.float32)
    x4 = jax.random.randint(k_ids4, (2, 8), 0, v4, dtype=jnp.int32)
    out4 = jax.block_until_ready(embeddings_forward(x4, table4, d4))
    ref4 = table4[x4] * math.sqrt(d4)
    assert out4.shape == (2, 8, d4)
    assert jnp.allclose(out4, ref4, atol=1e-2, rtol=1e-2)

    # --- Large-vocab (HBM DMA-gather) path ---
    d3, v3 = 128, 6000
    table3 = jax.random.normal(k_tab2, (v3, d3), dtype=jnp.float32)
    B3, S3 = 2, 64
    x3 = jax.random.randint(k_ids3, (B3, S3), 0, v3, dtype=jnp.int32)
    out3 = jax.block_until_ready(embeddings_forward(x3, table3, d3))
    ref3 = table3[x3] * math.sqrt(d3)
    assert out3.shape == (B3, S3, d3)
    assert jnp.allclose(out3, ref3, atol=1e-6, rtol=1e-6)

    print("KERNEL_OK")
</pallas_src>

<mosaic_0001>
module attributes {stable_mosaic.version = 11 : i64} {
  func.func @_embed_onehot_kernel(%arg0: i32, %arg1: memref<4x8x1xi32, #tpu.memory_space<vmem>>, %arg2: memref<4x50x128xf32, #tpu.memory_space<vmem>>, %arg3: memref<8x128xf32, #tpu.memory_space<vmem>>) attributes {dimension_semantics = [#tpu.dimension_semantics<parallel>], iteration_bounds = array<i64: 1>, scalar_prefetch = 0 : i64, scratch_operands = 0 : i64, tpu.core_type = #tpu.core_type<tc>, window_params = [{transform_indices = @transform_0, window_bounds = array<i64: 4, 8, 1>}, {pipeline_mode = #tpu.pipeline_mode<synchronous>, transform_indices = @transform_1, window_bounds = array<i64: 4, 50, 128>}, {transform_indices = @transform_2, window_bounds = array<i64: 8, 128>}]} {
    %0 = tpu.iota {dimensions = array<i32: 1>} : vector<8x50xi32>
    %c0 = arith.constant 0 : index
    %c0_0 = arith.constant 0 : index
    %c0_1 = arith.constant 0 : index
    %1 = vector.load %arg1[%c0, %c0_0, %c0_1] : memref<4x8x1xi32, #tpu.memory_space<vmem>>, vector<1x8x1xi32>
    %2 = vector.shape_cast %1 : vector<1x8x1xi32> to vector<8x1xi32>
    %3 = vector.broadcast %2 : vector<8x1xi32> to vector<8x50xi32>
    %4 = arith.cmpi eq, %3, %0 : vector<8x50xi32>
    %5 = arith.extui %4 : vector<8x50xi1> to vector<8x50xi32>
    %6 = arith.sitofp %5 : vector<8x50xi32> to vector<8x50xf32>
    %c0_2 = arith.constant 0 : index
    %c0_3 = arith.constant 0 : index
    %c0_4 = arith.constant 0 : index
    %7 = vector.load %arg2[%c0_2, %c0_3, %c0_4] : memref<4x50x128xf32, #tpu.memory_space<vmem>>, vector<1x50x128xf32>
    %8 = vector.shape_cast %7 : vector<1x50x128xf32> to vector<50x128xf32>
    %cst = arith.constant dense<0.000000e+00> : vector<8x128xf32>
    %9 = tpu.matmul %6, %8, %cst {dimension_numbers = #tpu.dot_dimension_numbers<[1], [0], [0], [1], [0, 0, 1, 1], [], []>} : vector<8x50xf32>, vector<50x128xf32>, vector<8x128xf32> -> vector<8x128xf32>
    %c1 = arith.constant 1 : index
    %c0_5 = arith.constant 0 : index
    %c0_6 = arith.constant 0 : index
    %10 = vector.load %arg1[%c1, %c0_5, %c0_6] : memref<4x8x1xi32, #tpu.memory_space<vmem>>, vector<1x8x1xi32>
    %11 = vector.shape_cast %10 : vector<1x8x1xi32> to vector<8x1xi32>
    %12 = vector.broadcast %11 : vector<8x1xi32> to vector<8x50xi32>
    %13 = arith.cmpi eq, %12, %0 : vector<8x50xi32>
    %14 = arith.extui %13 : vector<8x50xi1> to vector<8x50xi32>
    %15 = arith.sitofp %14 : vector<8x50xi32> to vector<8x50xf32>
    %c1_7 = arith.constant 1 : index
    %c0_8 = arith.constant 0 : index
    %c0_9 = arith.constant 0 : index
    %16 = vector.load %arg2[%c1_7, %c0_8, %c0_9] : memref<4x50x128xf32, #tpu.memory_space<vmem>>, vector<1x50x128xf32>
    %17 = vector.shape_cast %16 : vector<1x50x128xf32> to vector<50x128xf32>
    %cst_10 = arith.constant dense<0.000000e+00> : vector<8x128xf32>
    %18 = tpu.matmul %15, %17, %cst_10 {dimension_numbers = #tpu.dot_dimension_numbers<[1], [0], [0], [1], [0, 0, 1, 1], [], []>} : vector<8x50xf32>, vector<50x128xf32>, vector<8x128xf32> -> vector<8x128xf32>
    %19 = arith.addf %9, %18 : vector<8x128xf32>
    %c2 = arith.constant 2 : index
    %c0_11 = arith.constant 0 : index
    %c0_12 = arith.constant 0 : index
    %20 = vector.load %arg1[%c2, %c0_11, %c0_12] : memref<4x8x1xi32, #tpu.memory_space<vmem>>, vector<1x8x1xi32>
    %21 = vector.shape_cast %20 : vector<1x8x1xi32> to vector<8x1xi32>
    %22 = vector.broadcast %21 : vector<8x1xi32> to vector<8x50xi32>
    %23 = arith.cmpi eq, %22, %0 : vector<8x50xi32>
    %24 = arith.extui %23 : vector<8x50xi1> to vector<8x50xi32>
    %25 = arith.sitofp %24 : vector<8x50xi32> to vector<8x50xf32>
    %c2_13 = arith.constant 2 : index
    %c0_14 = arith.constant 0 : index
    %c0_15 = arith.constant 0 : index
    %26 = vector.load %arg2[%c2_13, %c0_14, %c0_15] : memref<4x50x128xf32, #tpu.memory_space<vmem>>, vector<1x50x128xf32>
    %27 = vector.shape_cast %26 : vector<1x50x128xf32> to vector<50x128xf32>
    %cst_16 = arith.constant dense<0.000000e+00> : vector<8x128xf32>
    %28 = tpu.matmul %25, %27, %cst_16 {dimension_numbers = #tpu.dot_dimension_numbers<[1], [0], [0], [1], [0, 0, 1, 1], [], []>} : vector<8x50xf32>, vector<50x128xf32>, vector<8x128xf32> -> vector<8x128xf32>
    %29 = arith.addf %19, %28 : vector<8x128xf32>
    %c3 = arith.constant 3 : index
    %c0_17 = arith.constant 0 : index
    %c0_18 = arith.constant 0 : index
    %30 = vector.load %arg1[%c3, %c0_17, %c0_18] : memref<4x8x1xi32, #tpu.memory_space<vmem>>, vector<1x8x1xi32>
    %31 = vector.shape_cast %30 : vector<1x8x1xi32> to vector<8x1xi32>
    %32 = vector.broadcast %31 : vector<8x1xi32> to vector<8x50xi32>
    %33 = arith.cmpi eq, %32, %0 : vector<8x50xi32>
    %34 = arith.extui %33 : vector<8x50xi1> to vector<8x50xi32>
    %35 = arith.sitofp %34 : vector<8x50xi32> to vector<8x50xf32>
    %c3_19 = arith.constant 3 : index
    %c0_20 = arith.constant 0 : index
    %c0_21 = arith.constant 0 : index
    %36 = vector.load %arg2[%c3_19, %c0_20, %c0_21] : memref<4x50x128xf32, #tpu.memory_space<vmem>>, vector<1x50x128xf32>
    %37 = vector.shape_cast %36 : vector<1x50x128xf32> to vector<50x128xf32>
    %cst_22 = arith.constant dense<0.000000e+00> : vector<8x128xf32>
    %38 = tpu.matmul %35, %37, %cst_22 {dimension_numbers = #tpu.dot_dimension_numbers<[1], [0], [0], [1], [0, 0, 1, 1], [], []>} : vector<8x50xf32>, vector<50x128xf32>, vector<8x128xf32> -> vector<8x128xf32>
    %39 = arith.addf %29, %38 : vector<8x128xf32>
    %cst_23 = arith.constant 5.65685415 : f32
    %40 = vector.broadcast %cst_23 : f32 to vector<8x128xf32>
    %41 = arith.mulf %39, %40 : vector<8x128xf32>
    %c0_24 = arith.constant 0 : index
    %c0_25 = arith.constant 0 : index
    %42 = vector.load %arg3[%c0_24, %c0_25] : memref<8x128xf32, #tpu.memory_space<vmem>>, vector<8x128xf32>
    tpu.vector_store %arg3[%c0_24, %c0_25], %41 {strides = array<i32>} : memref<8x128xf32, #tpu.memory_space<vmem>>, vector<8x128xf32>,
    return
  }
  func.func @transform_0(%arg0: i32) -> (i32, i32, i32) {
    %c0_i32 = arith.constant 0 : i32
    %c0_i32_0 = arith.constant 0 : i32
    %c0_i32_1 = arith.constant 0 : i32
    return %c0_i32, %arg0, %c0_i32_0 : i32, i32, i32
  }
  func.func @transform_1(%arg0: i32) -> (i32, i32, i32) {
    %c0_i32 = arith.constant 0 : i32
    %c0_i32_0 = arith.constant 0 : i32
    %c0_i32_1 = arith.constant 0 : i32
    %c0_i32_2 = arith.constant 0 : i32
    return %c0_i32, %c0_i32_0, %c0_i32_1 : i32, i32, i32
  }
  func.func @transform_2(%arg0: i32) -> (i32, i32) {
    %c0_i32 = arith.constant 0 : i32
    %c0_i32_0 = arith.constant 0 : i32
    return %arg0, %c0_i32 : i32, i32
  }
}

</mosaic_0001>

<llo_original>
// kernel: tpu_custom_call.1
$region0: #{tpu_custom_call.1}
  #allocation0 [shape = 'u32[]', space=smem, size = 0x4, offset = 0x4, fixed_abs, tag = 'smem constant byte address 0x4 - core index']
  #allocation1 [shape = 'u32[144,128]{1,0:T(1,128)}', space=vmem, size = 0x12000, scoped, tag = 'internal scratch']
  %s0 = inlined_call_operand.vmem [shape: s32[4,8,1], index: 0, kind: input, shape index: {}]
  %s1 = inlined_call_operand.vmem [shape: f32[4,50,128], index: 1, kind: input, shape index: {}]
  %s2 = inlined_call_operand.hbm [shape: f32[8,128], index: 2, kind: output, shape index: {}]
  %s3 = sld [smem:[#allocation0]]
  $region18: #{tpu_custom_call.1} parent=0
    _
  %s5 = ssub.s32 1, %s3
  %s6 = scalar_select 0, %s5, %s3
  $region1: #{tpu_custom_call.1} parent=0
    #allocation2 [shape = 'u8[4096]{0}', space=vmem, size = 0x1000, scoped, tag = 'output window, operand 0, single buffered']
    #allocation3 [shape = 's32[1]{0}', space=sflag, size = 0x4, scoped, tag = 'scoped memory for tpu_custom_call.1']
    %7 = vsyncpa [#allocation3], 0
    // Predicated region
    $region2: #{tpu_custom_call.1} parent=1 // pred_check
      _
    $region3: #{tpu_custom_call.1} parent=1 // pred_check_branch
      %9 = sbr.rel (0) target = $region5
    $region4: #{tpu_custom_call.1} parent=1 // pred_region
      _
    $region5: #{tpu_custom_call.1} parent=1 // pred_fallthru
      _
    // Predicated region
    $region6: #{tpu_custom_call.1} parent=1 // pred_check
      _
    $region7: #{tpu_custom_call.1} parent=1 // pred_check_branch
      %11 = sbr.rel (0) target = $region9
    $region8: #{tpu_custom_call.1} parent=1 // pred_region
      _
    $region9: #{tpu_custom_call.1} parent=1 // pred_fallthru
      _
    %v12 = vlaneseq
    %v13 = vand.u32 %v12, 127
    %v14 = vld [vmem:[%s0] sm:$0xff]
    %15 = vset.pattern.permute.xlu0 0
    %16 = vperm.xlu0 %15, %v14
    %v17 = vpop.permute.xlu0 %16
    %vm18 = vcmp.eq.s32.totalorder %v17, %v13
    %v19 = vsel %vm18, 1, 0
    %v20 = vcvt.s32.f32 %v19
    %v21 = vld [vmem:[%s1] sm:$0xff]
    %v22 = vld [vmem:[%s1 + $0x8] sm:$0xff]
    %v23 = vld [vmem:[%s1 + $0x10] sm:$0xff]
    %v24 = vld [vmem:[%s1 + $0x18] sm:$0xff]
    %v25 = vld [vmem:[%s1 + $0x20] sm:$0xff]
    %v26 = vld [vmem:[%s1 + $0x28] sm:$0xff]
    %v27 = vld [vmem:[%s1 + $0x30] sm:$0x3]
    %s28 = scalar_lea.vmem %s0, 8
    %v29 = vld [vmem:[%s28] sm:$0xff]
    %30 = vset.pattern.permute.xlu0 0
    %31 = vperm.xlu0 %30, %v29
    %v32 = vpop.permute.xlu0 %31
    %vm33 = vcmp.eq.s32.totalorder %v32, %v13
    %v34 = vsel %vm33, 1, 0
    %v35 = vcvt.s32.f32 %v34
    %s36 = scalar_lea.vmem %s1, 56
    %v37 = vld [vmem:[%s36] sm:$0xff]
    %v38 = vld [vmem:[%s36 + $0x8] sm:$0xff]
    %v39 = vld [vmem:[%s36 + $0x10] sm:$0xff]
    %v40 = vld [vmem:[%s36 + $0x18] sm:$0xff]
    %v41 = vld [vmem:[%s36 + $0x20] sm:$0xff]
    %v42 = vld [vmem:[%s36 + $0x28] sm:$0xff]
    %v43 = vld [vmem:[%s36 + $0x30] sm:$0x3]
    %vm44 = vcmask 408576
    %v46 = vsel %vm44, %v35, 0
    %vm48 = vcmask 1041408
    %v50 = vsel %vm48, %v43, 0
    %52 = vmatprep.subr.mxu0 0.0
    %53 = vmatpush1.msra.mxu0 %v37
    %54 = vmatprep.subr.mxu0 0.0
    %55 = vmatpush1.msra.mxu0 %v38
    %56 = vmatprep.subr.mxu0 0.0
    %57 = vmatpush1.msra.mxu0 %v39
    %58 = vmatprep.subr.mxu0 0.0
    %59 = vmatpush1.msra.mxu0 %v40
    %60 = vmatprep.subr.mxu0 0.0
    %61 = vmatpush1.msra.mxu0 %v41
    %62 = vmatprep.subr.mxu0 0.0
    %63 = vmatpush1.msra.mxu0 %v42
    %64 = vmatprep.subr.mxu0 0.0
    %65 = vmatpush1.msra.mxu0 %v50
    %66 = vmatprep.subr.mxu0 0.0
    %67 = vmatpush1.msra.mxu0 0.0
    %68 = vmatprep.subr.mxu0 0.0
    %69 = vmatpush1.msra.mxu0 0.0
    %70 = vmatprep.subr.mxu0 0.0
    %71 = vmatpush1.msra.mxu0 0.0
    %72 = vmatprep.subr.mxu0 0.0
    %73 = vmatpush1.msra.mxu0 0.0
    %74 = vmatprep.subr.mxu0 0.0
    %75 = vmatpush1.msra.mxu0 0.0
    %76 = vmatprep.subr.mxu0 0.0
    %77 = vmatpush1.msra.mxu0 0.0
    %78 = vmatprep.subr.mxu0 0.0
    %79 = vmatpush1.msra.mxu0 0.0
    %80 = vmatprep.subr.mxu0 0.0
    %81 = vmatpush1.msra.mxu0 0.0
    %82 = vmatprep.subr.mxu0 0.0
    %83 = vmatpush1.msra.mxu0 0.0
    %84 = vmatprep.subr.mxu0 0.0
    %85 = vmatpush1.msra.mxu0 0.0
    %86 = vmatprep.subr.mxu0 0.0
    %87 = vmatpush1.msra.mxu0 0.0
    %88 = vmatprep.subr.mxu0 0.0
    %89 = vmatpush1.msra.mxu0 0.0
    %90 = vmatprep.subr.mxu0 0.0
    %91 = vmatpush1.msra.mxu0 0.0
    %92 = vmatprep.subr.mxu0 0.0
    %93 = vmatpush1.msra.mxu0 0.0
    %94 = vmatprep.subr.mxu0 0.0
    %95 = vmatpush1.msra.mxu0 0.0
    %96 = vmatprep.subr.mxu0 0.0
    %97 = vmatpush1.msra.mxu0 0.0
    %98 = vmatprep.subr.mxu0 0.0
    %99 = vmatpush1.msra.mxu0 0.0
    %100 = vmatprep.subr.mxu0 0.0
    %101 = vmatpush1.msra.mxu0 0.0
    %102 = vmatprep.subr.mxu0 0.0
    %103 = vmatpush1.msra.mxu0 0.0
    %104 = vmatprep.subr.mxu0 0.0
    %105 = vmatpush1.msra.mxu0 0.0
    %106 = vmatprep.subr.mxu0 0.0
    %107 = vmatpush1.msra.mxu0 0.0
    %108 = vmatprep.subr.mxu0 0.0
    %109 = vmatpush1.msra.mxu0 0.0
    %110 = vmatprep.subr.mxu0 0.0
    %111 = vmatpush1.msra.mxu0 0.0
    %112 = vmatprep.subr.mxu0 0.0
    %113 = vmatpush1.msra.mxu0 0.0
    %114 = vmatprep.subr.mxu0 0.0
    %115 = vmatpush1.msra.mxu0 0.0
    %116 = vmatprep.mubr.f32.mxu0 0.0
    %117 = vmatmul.mubr.f32.gmra.mrb[0].mxu0 %v46
    %v118 = vpop.f32.mrb[0].mxu0
    %v119 = vadd.f32 0.0, %v118
    %v120 = vpop.f32.mrb[0].mxu0
    %121 = vdwg.mxu0
    %v123 = vsel %vm44, %v20, 0
    %v126 = vsel %vm48, %v27, 0
    %128 = vmatprep.subr.mxu0 0.0
    %129 = vmatpush1.msra.mxu0 %v21
    %130 = vmatprep.subr.mxu0 0.0
    %131 = vmatpush1.msra.mxu0 %v22
    %132 = vmatprep.subr.mxu0 0.0
    %133 = vmatpush1.msra.mxu0 %v23
    %134 = vmatprep.subr.mxu0 0.0
    %135 = vmatpush1.msra.mxu0 %v24
    %136 = vmatprep.subr.mxu0 0.0
    %137 = vmatpush1.msra.mxu0 %v25
    %138 = vmatprep.subr.mxu0 0.0
    %139 = vmatpush1.msra.mxu0 %v26
    %140 = vmatprep.subr.mxu0 0.0
    %141 = vmatpush1.msra.mxu0 %v126
    %142 = vmatprep.subr.mxu0 0.0
    %143 = vmatpush1.msra.mxu0 0.0
    %144 = vmatprep.subr.mxu0 0.0
    %145 = vmatpush1.msra.mxu0 0.0
    %146 = vmatprep.subr.mxu0 0.0
    %147 = vmatpush1.msra.mxu0 0.0
    %148 = vmatprep.subr.mxu0 0.0
    %149 = vmatpush1.msra.mxu0 0.0
    %150 = vmatprep.subr.mxu0 0.0
    %151 = vmatpush1.msra.mxu0 0.0
    %152 = vmatprep.subr.mxu0 0.0
    %153 = vmatpush1.msra.mxu0 0.0
    %154 = vmatprep.subr.mxu0 0.0
    %155 = vmatpush1.msra.mxu0 0.0
    %156 = vmatprep.subr.mxu0 0.0
    %157 = vmatpush1.msra.mxu0 0.0
    %158 = vmatprep.subr.mxu0 0.0
    %159 = vmatpush1.msra.mxu0 0.0
    %160 = vmatprep.subr.mxu0 0.0
    %161 = vmatpush1.msra.mxu0 0.0
    %162 = vmatprep.subr.mxu0 0.0
    %163 = vmatpush1.msra.mxu0 0.0
    %164 = vmatprep.subr.mxu0 0.0
    %165 = vmatpush1.msra.mxu0 0.0
    %166 = vmatprep.subr.mxu0 0.0
    %167 = vmatpush1.msra.mxu0 0.0
    %168 = vmatprep.subr.mxu0 0.0
    %169 = vmatpush1.msra.mxu0 0.0
    %170 = vmatprep.subr.mxu0 0.0
    %171 = vmatpush1.msra.mxu0 0.0
    %172 = vmatprep.subr.mxu0 0.0
    %173 = vmatpush1.msra.mxu0 0.0
    %174 = vmatprep.subr.mxu0 0.0
    %175 = vmatpush1.msra.mxu0 0.0
    %176 = vmatprep.subr.mxu0 0.0
    %177 = vmatpush1.msra.mxu0 0.0
    %178 = vmatprep.subr.mxu0 0.0
    %179 = vmatpush1.msra.mxu0 0.0
    %180 = vmatprep.subr.mxu0 0.0
    %181 = vmatpush1.msra.mxu0 0.0
    %182 = vmatprep.subr.mxu0 0.0
    %183 = vmatpush1.msra.mxu0 0.0
    %184 = vmatprep.subr.mxu0 0.0
    %185 = vmatpush1.msra.mxu0 0.0
    %186 = vmatprep.subr.mxu0 0.0
    %187 = vmatpush1.msra.mxu0 0.0
    %188 = vmatprep.subr.mxu0 0.0
    %189 = vmatpush1.msra.mxu0 0.0
    %190 = vmatprep.subr.mxu0 0.0
    %191 = vmatpush1.msra.mxu0 0.0
    %192 = vmatprep.mubr.f32.mxu0 0.0
    %193 = vmatmul.mubr.f32.gmra.mrb[0].mxu0 %v123
    %v194 = vpop.f32.mrb[0].mxu0
    %v195 = vadd.f32 %v119, %v194
    %v196 = vpop.f32.mrb[0].mxu0
    %197 = vdwg.mxu0
    %s198 = scalar_lea.vmem %s0, 16
    %v199 = vld [vmem:[%s198] sm:$0xff]
    %200 = vset.pattern.permute.xlu0 0
    %201 = vperm.xlu0 %200, %v199
    %v202 = vpop.permute.xlu0 %201
    %vm203 = vcmp.eq.s32.totalorder %v202, %v13
    %v204 = vsel %vm203, 1, 0
    %v205 = vcvt.s32.f32 %v204
    %s206 = scalar_lea.vmem %s1, 112
    %v207 = vld [vmem:[%s206] sm:$0xff]
    %v208 = vld [vmem:[%s206 + $0x8] sm:$0xff]
    %v209 = vld [vmem:[%s206 + $0x10] sm:$0xff]
    %v210 = vld [vmem:[%s206 + $0x18] sm:$0xff]
    %v211 = vld [vmem:[%s206 + $0x20] sm:$0xff]
    %v212 = vld [vmem:[%s206 + $0x28] sm:$0xff]
    %v213 = vld [vmem:[%s206 + $0x30] sm:$0x3]
    %v215 = vsel %vm44, %v205, 0
    %v218 = vsel %vm48, %v213, 0
    %220 = vmatprep.subr.mxu0 0.0
    %221 = vmatpush1.msra.mxu0 %v207
    %222 = vmatprep.subr.mxu0 0.0
    %223 = vmatpush1.msra.mxu0 %v208
    %224 = vmatprep.subr.mxu0 0.0
    %225 = vmatpush1.msra.mxu0 %v209
    %226 = vmatprep.subr.mxu0 0.0
    %227 = vmatpush1.msra.mxu0 %v210
    %228 = vmatprep.subr.mxu0 0.0
    %229 = vmatpush1.msra.mxu0 %v211
    %230 = vmatprep.subr.mxu0 0.0
    %231 = vmatpush1.msra.mxu0 %v212
    %232 = vmatprep.subr.mxu0 0.0
    %233 = vmatpush1.msra.mxu0 %v218
    %234 = vmatprep.subr.mxu0 0.0
    %235 = vmatpush1.msra.mxu0 0.0
    %236 = vmatprep.subr.mxu0 0.0
    %237 = vmatpush1.msra.mxu0 0.0
    %238 = vmatprep.subr.mxu0 0.0
    %239 = vmatpush1.msra.mxu0 0.0
    %240 = vmatprep.subr.mxu0 0.0
    %241 = vmatpush1.msra.mxu0 0.0
    %242 = vmatprep.subr.mxu0 0.0
    %243 = vmatpush1.msra.mxu0 0.0
    %244 = vmatprep.subr.mxu0 0.0
    %245 = vmatpush1.msra.mxu0 0.0
    %246 = vmatprep.subr.mxu0 0.0
    %247 = vmatpush1.msra.mxu0 0.0
    %248 = vmatprep.subr.mxu0 0.0
    %249 = vmatpush1.msra.mxu0 0.0
    %250 = vmatprep.subr.mxu0 0.0
    %251 = vmatpush1.msra.mxu0 0.0
    %252 = vmatprep.subr.mxu0 0.0
    %253 = vmatpush1.msra.mxu0 0.0
    %254 = vmatprep.subr.mxu0 0.0
    %255 = vmatpush1.msra.mxu0 0.0
    %256 = vmatprep.subr.mxu0 0.0
    %257 = vmatpush1.msra.mxu0 0.0
    %258 = vmatprep.subr.mxu0 0.0
    %259 = vmatpush1.msra.mxu0 0.0
    %260 = vmatprep.subr.mxu0 0.0
    %261 = vmatpush1.msra.mxu0 0.0
    %262 = vmatprep.subr.mxu0 0.0
    %263 = vmatpush1.msra.mxu0 0.0
    %264 = vmatprep.subr.mxu0 0.0
    %265 = vmatpush1.msra.mxu0 0.0
    %266 = vmatprep.subr.mxu0 0.0
    %267 = vmatpush1.msra.mxu0 0.0
    %268 = vmatprep.subr.mxu0 0.0
    %269 = vmatpush1.msra.mxu0 0.0
    %270 = vmatprep.subr.mxu0 0.0
    %271 = vmatpush1.msra.mxu0 0.0
    %272 = vmatprep.subr.mxu0 0.0
    %273 = vmatpush1.msra.mxu0 0.0
    %274 = vmatprep.subr.mxu0 0.0
    %275 = vmatpush1.msra.mxu0 0.0
    %276 = vmatprep.subr.mxu0 0.0
    %277 = vmatpush1.msra.mxu0 0.0
    %278 = vmatprep.subr.mxu0 0.0
    %279 = vmatpush1.msra.mxu0 0.0
    %280 = vmatprep.subr.mxu0 0.0
    %281 = vmatpush1.msra.mxu0 0.0
    %282 = vmatprep.subr.mxu0 0.0
    %283 = vmatpush1.msra.mxu0 0.0
    %284 = vmatprep.mubr.f32.mxu0 0.0
    %285 = vmatmul.mubr.f32.gmra.mrb[0].mxu0 %v215
    %v286 = vpop.f32.mrb[0].mxu0
    %v287 = vadd.f32 0.0, %v286
    %v288 = vpop.f32.mrb[0].mxu0
    %289 = vdwg.mxu0
    %v290 = vadd.f32 %v195, %v287
    %s291 = scalar_lea.vmem %s0, 24
    %v292 = vld [vmem:[%s291] sm:$0xff]
    %293 = vset.pattern.permute.xlu0 0
    %294 = vperm.xlu0 %293, %v292
    %v295 = vpop.permute.xlu0 %294
    %vm296 = vcmp.eq.s32.totalorder %v295, %v13
    %v297 = vsel %vm296, 1, 0
    %v298 = vcvt.s32.f32 %v297
    %s299 = scalar_lea.vmem %s1, 168
    %v300 = vld [vmem:[%s299] sm:$0xff]
    %v301 = vld [vmem:[%s299 + $0x8] sm:$0xff]
    %v302 = vld [vmem:[%s299 + $0x10] sm:$0xff]
    %v303 = vld [vmem:[%s299 + $0x18] sm:$0xff]
    %v304 = vld [vmem:[%s299 + $0x20] sm:$0xff]
    %v305 = vld [vmem:[%s299 + $0x28] sm:$0xff]
    %v306 = vld [vmem:[%s299 + $0x30] sm:$0x3]
    %v308 = vsel %vm44, %v298, 0
    %v311 = vsel %vm48, %v306, 0
    %313 = vmatprep.subr.mxu0 0.0
    %314 = vmatpush1.msra.mxu0 %v300
    %315 = vmatprep.subr.mxu0 0.0
    %316 = vmatpush1.msra.mxu0 %v301
    %317 = vmatprep.subr.mxu0 0.0
    %318 = vmatpush1.msra.mxu0 %v302
    %319 = vmatprep.subr.mxu0 0.0
    %320 = vmatpush1.msra.mxu0 %v303
    %321 = vmatprep.subr.mxu0 0.0
    %322 = vmatpush1.msra.mxu0 %v304
    %323 = vmatprep.subr.mxu0 0.0
    %324 = vmatpush1.msra.mxu0 %v305
    %325 = vmatprep.subr.mxu0 0.0
    %326 = vmatpush1.msra.mxu0 %v311
    %327 = vmatprep.subr.mxu0 0.0
    %328 = vmatpush1.msra.mxu0 0.0
    %329 = vmatprep.subr.mxu0 0.0
    %330 = vmatpush1.msra.mxu0 0.0
    %331 = vmatprep.subr.mxu0 0.0
    %332 = vmatpush1.msra.mxu0 0.0
    %333 = vmatprep.subr.mxu0 0.0
    %334 = vmatpush1.msra.mxu0 0.0
    %335 = vmatprep.subr.mxu0 0.0
    %336 = vmatpush1.msra.mxu0 0.0
    %337 = vmatprep.subr.mxu0 0.0
    %338 = vmatpush1.msra.mxu0 0.0
    %339 = vmatprep.subr.mxu0 0.0
    %340 = vmatpush1.msra.mxu0 0.0
    %341 = vmatprep.subr.mxu0 0.0
    %342 = vmatpush1.msra.mxu0 0.0
    %343 = vmatprep.subr.mxu0 0.0
    %344 = vmatpush1.msra.mxu0 0.0
    %345 = vmatprep.subr.mxu0 0.0
    %346 = vmatpush1.msra.mxu0 0.0
    %347 = vmatprep.subr.mxu0 0.0
    %348 = vmatpush1.msra.mxu0 0.0
    %349 = vmatprep.subr.mxu0 0.0
    %350 = vmatpush1.msra.mxu0 0.0
    %351 = vmatprep.subr.mxu0 0.0
    %352 = vmatpush1.msra.mxu0 0.0
    %353 = vmatprep.subr.mxu0 0.0
    %354 = vmatpush1.msra.mxu0 0.0
    %355 = vmatprep.subr.mxu0 0.0
    %356 = vmatpush1.msra.mxu0 0.0
    %357 = vmatprep.subr.mxu0 0.0
    %358 = vmatpush1.msra.mxu0 0.0
    %359 = vmatprep.subr.mxu0 0.0
    %360 = vmatpush1.msra.mxu0 0.0
    %361 = vmatprep.subr.mxu0 0.0
    %362 = vmatpush1.msra.mxu0 0.0
    %363 = vmatprep.subr.mxu0 0.0
    %364 = vmatpush1.msra.mxu0 0.0
    %365 = vmatprep.subr.mxu0 0.0
    %366 = vmatpush1.msra.mxu0 0.0
    %367 = vmatprep.subr.mxu0 0.0
    %368 = vmatpush1.msra.mxu0 0.0
    %369 = vmatprep.subr.mxu0 0.0
    %370 = vmatpush1.msra.mxu0 0.0
    %371 = vmatprep.subr.mxu0 0.0
    %372 = vmatpush1.msra.mxu0 0.0
    %373 = vmatprep.subr.mxu0 0.0
    %374 = vmatpush1.msra.mxu0 0.0
    %375 = vmatprep.subr.mxu0 0.0
    %376 = vmatpush1.msra.mxu0 0.0
    %377 = vmatprep.mubr.f32.mxu0 0.0
    %378 = vmatmul.mubr.f32.gmra.mrb[0].mxu0 %v308
    %v379 = vpop.f32.mrb[0].mxu0
    %v380 = vadd.f32 0.0, %v379
    %v381 = vpop.f32.mrb[0].mxu0
    %382 = vdwg.mxu0
    %v383 = vadd.f32 %v290, %v380
    %v384 = vmul.f32 %v383, 5.656854
    %385 = vst [vmem:[#allocation2] sm:$0xff] %v384
    // Predicated region
    $region10: #{tpu_custom_call.1} parent=1 // pred_check
      _
    $region11: #{tpu_custom_call.1} parent=1 // pred_check_branch
      %387 = sbr.rel (0) target = $region13
    $region12: #{tpu_custom_call.1} parent=1 // pred_region
      %s389 = ssub.s32 128, 128
      %390 = vsyncadd [#allocation3], %s389
      %s392 = sshll.u32 [#allocation2], 4
      %s393 = int_to_ptr.vmem [resolvable:$true] %s392
      %395 = dma.vmem_to_hbm [thread:$0]  %s393, 128, %s2, [#allocation3]
    $region13: #{tpu_custom_call.1} parent=1 // pred_fallthru
      _
    // Predicated region
    $region14: #{tpu_custom_call.1} parent=1 // pred_check
      _
    $region15: #{tpu_custom_call.1} parent=1 // pred_check_branch
      %397 = sbr.rel (0) target = $region17
    $region16: #{tpu_custom_call.1} parent=1 // pred_region
      %398 = dma.done [#allocation3], 128
    $region17: #{tpu_custom_call.1} parent=1 // pred_fallthru
      _
    %399 = vsyncpa [#allocation3], 1

</llo_original>
